<compile_context>
chip_gen: v6e
topology: v6e:2x2x1
jax: 0.10.0
libtpu: 0.0.40
codegen_flags: <defaults>
</compile_context>

<pallas_src>
import functools

import jax
import jax.numpy as jnp
from jax.experimental import pallas as pl
from jax.experimental.pallas import tpu as pltpu


def _round_up(n, m):
    return ((n + m - 1) // m) * m


def _game_model_kernel(H, W, F, H_pad, num_actions,
                       x_ref, wconv_ref, bconv_ref, wh_ref, bh_ref,
                       out_ref, pool_ref):
    """One batch tile.

    x_ref:     (TB*H_pad, (W+2)*C)  bf16   padded image rows, lanes = (w_pad, c)
    wconv_ref: (3, (W+2)*C, W*F)    bf16   per-kernel-row block-diagonal weights
    bconv_ref: (1, W*F)             f32    conv bias tiled per (w, f) lane
    wh_ref:    (F, AHp)             bf16   fused policy|value head weight
    bh_ref:    (1, AHp)             f32    fused head bias
    out_ref:   (1, TB, AHp)         f32
    pool_ref:  (TB, F)              f32    VMEM scratch for pooled features
    """
    R = x_ref.shape[0]              # TB * H_pad
    TB = R // H_pad
    M = R - 2                       # conv output rows computed per tile

    # ---- 3x3 conv: 3 bf16 GEMMs (one per kernel row) on the MXU, f32 acc ----
    # Column taps (kw) and the channel contraction are folded into the
    # block-diagonal weight matrices built in the wrapper, so each GEMM maps
    # input lanes (w_pad, c) -> output lanes (w, f) in one pass.
    x = x_ref[...]                                                   # aligned full load
    y0 = jnp.dot(x, wconv_ref[0], preferred_element_type=jnp.float32)
    y1 = jnp.dot(x, wconv_ref[1], preferred_element_type=jnp.float32)
    y2 = jnp.dot(x, wconv_ref[2], preferred_element_type=jnp.float32)
    # Row taps: output row r (conv centered at padded row r+1) sums the three
    # GEMM results at row offsets 0/1/2 (cheap f32 sublane shifts).
    acc = y0[0:M, :] + y1[1:M + 1, :] + y2[2:M + 2, :]               # (M, W*F) f32

    feat = jnp.maximum(acc + bconv_ref[...], 0.0)                    # f32 ReLU (VPU)

    # ---- global average pool, all on the VPU (no pooling GEMM) ----
    # sum over w: W static lane-group slices of width F
    s = feat[:, 0:F]
    for w in range(1, W):
        s = s + feat[:, w * F:(w + 1) * F]                           # (M, F) f32

    # sum over h: per-batch aligned row groups (rows [b*H_pad, b*H_pad+H)),
    # 1/HW scale kept in f32 (exact for non-power-of-two boards).
    inv_hw = 1.0 / (H * W)
    for b in range(TB):
        part = jnp.sum(s[b * H_pad:b * H_pad + H, :], axis=0, keepdims=True)
        pool_ref[pl.ds(b, 1), :] = part * inv_hw
    pooled = pool_ref[...]                                           # (TB, F) f32

    # ---- fused policy|value head: one lane-dense bf16 GEMM + f32 bias ----
    heads = jnp.dot(pooled.astype(wh_ref.dtype), wh_ref[...],
                    preferred_element_type=jnp.float32) + bh_ref[...]

    # tanh only on the value column (lane index == num_actions); policy linear.
    col = jax.lax.broadcasted_iota(jnp.int32, heads.shape, 1)
    out_ref[0] = jnp.where(col == num_actions, jnp.tanh(heads), heads)


def game_model_forward(x, params):
    """x: (B, C, H, W) float32 (PyTorch NCHW convention).
    Returns (policy (B, num_actions), value (B, 1))."""
    B, C, H, W = x.shape
    wc, bc = params['wc'], params['bc']          # (3,3,C,F), (F,)
    wp, bp = params['wp'], params['bp']          # (F,A), (A,)
    wv, bv = params['wv'], params['bv']          # (F,1), (1,)
    F = wc.shape[-1]
    A = wp.shape[-1]

    H_pad = _round_up(H + 2, 8)                  # padded rows per batch (>= H+2)
    Wc = (W + 2) * C                             # lanes of one padded row: (w_pad, c)
    NWF = W * F                                  # conv GEMM output lanes: (w, f)
    AHp = _round_up(A + 1, 128)                  # fused policy+value output lanes

    # Batch tiling: modest tiles (amortize ~0.35us/step overhead) but >= 2 grid
    # steps whenever B >= 2 so both v7x TensorCores get work.
    TB = min(32, B)
    if B >= 2:
        n_tiles = max(2, pl.cdiv(B, TB))
        TB = pl.cdiv(B, n_tiles)
    n_tiles = pl.cdiv(B, TB)
    B_pad = n_tiles * TB

    # --- activations: NCHW -> zero-padded NHWC rows, flattened, bf16 ---
    # TODO(synk): this transpose+pad is still one small XLA copy in HBM;
    # streaming raw NCHW and transposing in-kernel would remove it entirely.
    x_nhwc = jnp.transpose(x, (0, 2, 3, 1))                          # (B, H, W, C)
    xp = jnp.pad(x_nhwc, ((0, B_pad - B), (1, H_pad - H - 1), (1, 1), (0, 0)))
    x2d = xp.reshape(B_pad * H_pad, Wc).astype(jnp.bfloat16)

    # --- conv weights: one block-diagonal (lane-shift) matrix per kernel row ---
    # wconv[kh, (w+kw)*C + c, w*F + f] = wc[kh, kw, c, f]
    wconv = jnp.zeros((3, Wc, NWF), jnp.float32)
    for kw in range(3):
        for w in range(W):
            wconv = wconv.at[:, (w + kw) * C:(w + kw + 1) * C,
                             w * F:(w + 1) * F].set(wc[:, kw, :, :])
    wconv = wconv.astype(jnp.bfloat16)
    bconv = jnp.tile(bc, W).reshape(1, NWF).astype(jnp.float32)      # bc[f] per (w,f) lane

    # --- fused (policy | value) head: (F, AHp) bf16 weight, (1, AHp) f32 bias ---
    w_heads = jnp.concatenate([wp, wv], axis=1)                      # (F, A+1)
    w_heads = jnp.pad(w_heads, ((0, 0), (0, AHp - (A + 1)))).astype(jnp.bfloat16)
    b_heads = jnp.concatenate([bp, bv], axis=0)
    b_heads = jnp.pad(b_heads, (0, AHp - (A + 1))).reshape(1, AHp).astype(jnp.float32)

    grid_spec = pltpu.PrefetchScalarGridSpec(
        num_scalar_prefetch=0,
        grid=(n_tiles,),
        in_specs=[
            pl.BlockSpec((TB * H_pad, Wc), lambda i: (i, 0)),        # activations (streamed)
            pl.BlockSpec((3, Wc, NWF), lambda i: (0, 0, 0)),         # conv tap weights (resident)
            pl.BlockSpec((1, NWF), lambda i: (0, 0)),                # conv bias
            pl.BlockSpec((F, AHp), lambda i: (0, 0)),                # fused head weight
            pl.BlockSpec((1, AHp), lambda i: (0, 0)),                # fused head bias
        ],
        out_specs=pl.BlockSpec((1, TB, AHp), lambda i: (i, 0, 0)),
        scratch_shapes=[pltpu.VMEM((TB, F), jnp.float32)],
    )

    out = pl.pallas_call(
        functools.partial(_game_model_kernel, H, W, F, H_pad, A),
        out_shape=jax.ShapeDtypeStruct((n_tiles, TB, AHp), jnp.float32),
        grid_spec=grid_spec,
        compiler_params=pltpu.CompilerParams(
            dimension_semantics=("parallel",)),
    )(x2d, wconv, bconv, w_heads, b_heads)

    out = out.reshape(B_pad, AHp)
    policy = out[:B, :A]
    value = out[:B, A:A + 1]
    return policy, value


def init_params(key, in_channels, num_filters, num_actions):
    k = jax.random.split(key, 6)
    scale = 0.1
    return {
        'wc': scale * jax.random.normal(k[0], (3, 3, in_channels, num_filters), jnp.float32),
        'bc': scale * jax.random.normal(k[1], (num_filters,), jnp.float32),
        'wp': scale * jax.random.normal(k[2], (num_filters, num_actions), jnp.float32),
        'bp': scale * jax.random.normal(k[3], (num_actions,), jnp.float32),
        'wv': scale * jax.random.normal(k[4], (num_filters, 1), jnp.float32),
        'bv': scale * jax.random.normal(k[5], (1,), jnp.float32),
    }


def reference_forward(x, params):
    """Pure-JAX f32 reference matching PyTorch conv2d(pad=1)+relu -> GAP -> heads."""
    w_oihw = jnp.transpose(params['wc'], (3, 2, 0, 1))               # (F, C, 3, 3)
    conv = jax.lax.conv_general_dilated(
        x, w_oihw, window_strides=(1, 1), padding='SAME',
        dimension_numbers=('NCHW', 'OIHW', 'NCHW'))
    conv = conv + params['bc'][None, :, None, None]
    feat = jnp.maximum(conv, 0.0)
    pooled = feat.mean(axis=(2, 3))                                  # (B, F)
    policy = pooled @ params['wp'] + params['bp']
    value = jnp.tanh(pooled @ params['wv'] + params['bv'])
    return policy, value


if __name__ == "__main__":
    key = jax.random.PRNGKey(0)
    kx, kp = jax.random.split(key)

    B, C, H, W = 2, 4, 16, 16          # board_size=16, input_channels=4
    num_filters = 32
    num_actions = H * W                # 256

    x = jax.random.normal(kx, (B, C, H, W), jnp.float32)
    params = init_params(kp, C, num_filters, num_actions)

    policy, value = game_model_forward(x, params)
    policy = jax.block_until_ready(policy)
    value = jax.block_until_ready(value)

    ref_policy, ref_value = reference_forward(x, params)

    assert policy.shape == (B, num_actions) and policy.dtype == jnp.float32
    assert value.shape == (B, 1) and value.dtype == jnp.float32
    # bf16 MXU operands -> compare against the f32 reference with bf16-level tolerance
    assert jnp.allclose(policy, ref_policy, atol=2e-2, rtol=2e-2)
    assert jnp.allclose(value, ref_value, atol=2e-2, rtol=2e-2)

    print("KERNEL_OK")
</pallas_src>

<mosaic_0001>
module attributes {stable_mosaic.version = 11 : i64} {
  func.func @_game_model_kernel(%arg0: i32, %arg1: memref<24x72xbf16, #tpu.memory_space<vmem>>, %arg2: memref<3x72x512xbf16, #tpu.memory_space<vmem>>, %arg3: memref<1x512xf32, #tpu.memory_space<vmem>>, %arg4: memref<32x384xbf16, #tpu.memory_space<vmem>>, %arg5: memref<1x384xf32, #tpu.memory_space<vmem>>, %arg6: memref<1x1x384xf32, #tpu.memory_space<vmem>>, %arg7: memref<1x32xf32, #tpu.memory_space<vmem>>) attributes {dimension_semantics = [#tpu.dimension_semantics<parallel>], iteration_bounds = array<i64: 2>, scalar_prefetch = 0 : i64, scratch_operands = 1 : i64, tpu.core_type = #tpu.core_type<tc>, window_params = [{transform_indices = @transform_0, window_bounds = array<i64: 24, 72>}, {pipeline_mode = #tpu.pipeline_mode<synchronous>, transform_indices = @transform_1, window_bounds = array<i64: 3, 72, 512>}, {pipeline_mode = #tpu.pipeline_mode<synchronous>, transform_indices = @transform_2, window_bounds = array<i64: 1, 512>}, {pipeline_mode = #tpu.pipeline_mode<synchronous>, transform_indices = @transform_3, window_bounds = array<i64: 32, 384>}, {pipeline_mode = #tpu.pipeline_mode<synchronous>, transform_indices = @transform_4, window_bounds = array<i64: 1, 384>}, {transform_indices = @transform_5, window_bounds = array<i64: 1, 1, 384>}]} {
    %c0 = arith.constant 0 : index
    %c0_0 = arith.constant 0 : index
    %0 = vector.load %arg1[%c0, %c0_0] : memref<24x72xbf16, #tpu.memory_space<vmem>>, vector<24x72xbf16>
    %c0_1 = arith.constant 0 : index
    %c0_2 = arith.constant 0 : index
    %c0_3 = arith.constant 0 : index
    %1 = vector.load %arg2[%c0_1, %c0_2, %c0_3] : memref<3x72x512xbf16, #tpu.memory_space<vmem>>, vector<1x72x512xbf16>
    %2 = vector.shape_cast %1 : vector<1x72x512xbf16> to vector<72x512xbf16>
    %cst = arith.constant dense<0.000000e+00> : vector<24x512xf32>
    %3 = tpu.matmul %0, %2, %cst {dimension_numbers = #tpu.dot_dimension_numbers<[1], [0], [0], [1], [0, 0, 1, 1], [], []>} : vector<24x72xbf16>, vector<72x512xbf16>, vector<24x512xf32> -> vector<24x512xf32>
    %c1 = arith.constant 1 : index
    %c0_4 = arith.constant 0 : index
    %c0_5 = arith.constant 0 : index
    %4 = vector.load %arg2[%c1, %c0_4, %c0_5] : memref<3x72x512xbf16, #tpu.memory_space<vmem>>, vector<1x72x512xbf16>
    %5 = vector.shape_cast %4 : vector<1x72x512xbf16> to vector<72x512xbf16>
    %cst_6 = arith.constant dense<0.000000e+00> : vector<24x512xf32>
    %6 = tpu.matmul %0, %5, %cst_6 {dimension_numbers = #tpu.dot_dimension_numbers<[1], [0], [0], [1], [0, 0, 1, 1], [], []>} : vector<24x72xbf16>, vector<72x512xbf16>, vector<24x512xf32> -> vector<24x512xf32>
    %c2 = arith.constant 2 : index
    %c0_7 = arith.constant 0 : index
    %c0_8 = arith.constant 0 : index
    %7 = vector.load %arg2[%c2, %c0_7, %c0_8] : memref<3x72x512xbf16, #tpu.memory_space<vmem>>, vector<1x72x512xbf16>
    %8 = vector.shape_cast %7 : vector<1x72x512xbf16> to vector<72x512xbf16>
    %cst_9 = arith.constant dense<0.000000e+00> : vector<24x512xf32>
    %9 = tpu.matmul %0, %8, %cst_9 {dimension_numbers = #tpu.dot_dimension_numbers<[1], [0], [0], [1], [0, 0, 1, 1], [], []>} : vector<24x72xbf16>, vector<72x512xbf16>, vector<24x512xf32> -> vector<24x512xf32>
    %10 = vector.extract_strided_slice %3 {offsets = [0, 0], sizes = [22, 512], strides = [1, 1]} : vector<24x512xf32> to vector<22x512xf32>
    %11 = vector.extract_strided_slice %6 {offsets = [1, 0], sizes = [22, 512], strides = [1, 1]} : vector<24x512xf32> to vector<22x512xf32>
    %12 = arith.addf %10, %11 : vector<22x512xf32>
    %13 = vector.extract_strided_slice %9 {offsets = [2, 0], sizes = [22, 512], strides = [1, 1]} : vector<24x512xf32> to vector<22x512xf32>
    %14 = arith.addf %12, %13 : vector<22x512xf32>
    %c0_10 = arith.constant 0 : index
    %c0_11 = arith.constant 0 : index
    %15 = vector.load %arg3[%c0_10, %c0_11] : memref<1x512xf32, #tpu.memory_space<vmem>>, vector<1x512xf32>
    %16 = vector.broadcast %15 : vector<1x512xf32> to vector<22x512xf32>
    %17 = arith.addf %14, %16 : vector<22x512xf32>
    %cst_12 = arith.constant 0.000000e+00 : f32
    %18 = vector.broadcast %cst_12 : f32 to vector<22x512xf32>
    %19 = arith.maximumf %17, %18 : vector<22x512xf32>
    %20 = vector.extract_strided_slice %19 {offsets = [0, 0], sizes = [22, 32], strides = [1, 1]} : vector<22x512xf32> to vector<22x32xf32>
    %21 = vector.extract_strided_slice %19 {offsets = [0, 32], sizes = [22, 32], strides = [1, 1]} : vector<22x512xf32> to vector<22x32xf32>
    %22 = arith.addf %20, %21 : vector<22x32xf32>
    %23 = vector.extract_strided_slice %19 {offsets = [0, 64], sizes = [22, 32], strides = [1, 1]} : vector<22x512xf32> to vector<22x32xf32>
    %24 = arith.addf %22, %23 : vector<22x32xf32>
    %25 = vector.extract_strided_slice %19 {offsets = [0, 96], sizes = [22, 32], strides = [1, 1]} : vector<22x512xf32> to vector<22x32xf32>
    %26 = arith.addf %24, %25 : vector<22x32xf32>
    %27 = vector.extract_strided_slice %19 {offsets = [0, 128], sizes = [22, 32], strides = [1, 1]} : vector<22x512xf32> to vector<22x32xf32>
    %28 = arith.addf %26, %27 : vector<22x32xf32>
    %29 = vector.extract_strided_slice %19 {offsets = [0, 160], sizes = [22, 32], strides = [1, 1]} : vector<22x512xf32> to vector<22x32xf32>
    %30 = arith.addf %28, %29 : vector<22x32xf32>
    %31 = vector.extract_strided_slice %19 {offsets = [0, 192], sizes = [22, 32], strides = [1, 1]} : vector<22x512xf32> to vector<22x32xf32>
    %32 = arith.addf %30, %31 : vector<22x32xf32>
    %33 = vector.extract_strided_slice %19 {offsets = [0, 224], sizes = [22, 32], strides = [1, 1]} : vector<22x512xf32> to vector<22x32xf32>
    %34 = arith.addf %32, %33 : vector<22x32xf32>
    %35 = vector.extract_strided_slice %19 {offsets = [0, 256], sizes = [22, 32], strides = [1, 1]} : vector<22x512xf32> to vector<22x32xf32>
    %36 = arith.addf %34, %35 : vector<22x32xf32>
    %37 = vector.extract_strided_slice %19 {offsets = [0, 288], sizes = [22, 32], strides = [1, 1]} : vector<22x512xf32> to vector<22x32xf32>
    %38 = arith.addf %36, %37 : vector<22x32xf32>
    %39 = vector.extract_strided_slice %19 {offsets = [0, 320], sizes = [22, 32], strides = [1, 1]} : vector<22x512xf32> to vector<22x32xf32>
    %40 = arith.addf %38, %39 : vector<22x32xf32>
    %41 = vector.extract_strided_slice %19 {offsets = [0, 352], sizes = [22, 32], strides = [1, 1]} : vector<22x512xf32> to vector<22x32xf32>
    %42 = arith.addf %40, %41 : vector<22x32xf32>
    %43 = vector.extract_strided_slice %19 {offsets = [0, 384], sizes = [22, 32], strides = [1, 1]} : vector<22x512xf32> to vector<22x32xf32>
    %44 = arith.addf %42, %43 : vector<22x32xf32>
    %45 = vector.extract_strided_slice %19 {offsets = [0, 416], sizes = [22, 32], strides = [1, 1]} : vector<22x512xf32> to vector<22x32xf32>
    %46 = arith.addf %44, %45 : vector<22x32xf32>
    %47 = vector.extract_strided_slice %19 {offsets = [0, 448], sizes = [22, 32], strides = [1, 1]} : vector<22x512xf32> to vector<22x32xf32>
    %48 = arith.addf %46, %47 : vector<22x32xf32>
    %49 = vector.extract_strided_slice %19 {offsets = [0, 480], sizes = [22, 32], strides = [1, 1]} : vector<22x512xf32> to vector<22x32xf32>
    %50 = arith.addf %48, %49 : vector<22x32xf32>
    %51 = vector.extract_strided_slice %50 {offsets = [0, 0], sizes = [16, 32], strides = [1, 1]} : vector<22x32xf32> to vector<16x32xf32>
    %cst_13 = arith.constant dense<0.000000e+00> : vector<32xf32>
    %52 = vector.multi_reduction <add>, %51, %cst_13 [0] : vector<16x32xf32> to vector<32xf32>
    %53 = vector.shape_cast %52 : vector<32xf32> to vector<1x32xf32>
    %cst_14 = arith.constant 3.906250e-03 : f32
    %54 = vector.broadcast %cst_14 : f32 to vector<1x32xf32>
    %55 = arith.mulf %53, %54 : vector<1x32xf32>
    %c0_15 = arith.constant 0 : index
    %c0_16 = arith.constant 0 : index
    %56 = vector.load %arg7[%c0_15, %c0_16] : memref<1x32xf32, #tpu.memory_space<vmem>>, vector<1x32xf32>
    tpu.vector_store %arg7[%c0_15, %c0_16], %55 {strides = array<i32>} : memref<1x32xf32, #tpu.memory_space<vmem>>, vector<1x32xf32>,
    %c0_17 = arith.constant 0 : index
    %c0_18 = arith.constant 0 : index
    %57 = vector.load %arg7[%c0_17, %c0_18] : memref<1x32xf32, #tpu.memory_space<vmem>>, vector<1x32xf32>
    %58 = arith.truncf %57 : vector<1x32xf32> to vector<1x32xbf16>
    %c0_19 = arith.constant 0 : index
    %c0_20 = arith.constant 0 : index
    %59 = vector.load %arg4[%c0_19, %c0_20] : memref<32x384xbf16, #tpu.memory_space<vmem>>, vector<32x384xbf16>
    %cst_21 = arith.constant dense<0.000000e+00> : vector<1x384xf32>
    %60 = tpu.matmul %58, %59, %cst_21 {dimension_numbers = #tpu.dot_dimension_numbers<[1], [0], [0], [1], [0, 0, 1, 1], [], []>} : vector<1x32xbf16>, vector<32x384xbf16>, vector<1x384xf32> -> vector<1x384xf32>
    %c0_22 = arith.constant 0 : index
    %c0_23 = arith.constant 0 : index
    %61 = vector.load %arg5[%c0_22, %c0_23] : memref<1x384xf32, #tpu.memory_space<vmem>>, vector<1x384xf32>
    %62 = arith.addf %60, %61 : vector<1x384xf32>
    %63 = tpu.iota {dimensions = array<i32: 1>} : vector<1x384xi32>
    %c256_i32 = arith.constant 256 : i32
    %64 = vector.broadcast %c256_i32 : i32 to vector<1x384xi32>
    %65 = arith.cmpi eq, %63, %64 : vector<1x384xi32>
    %66 = math.tanh %62 : vector<1x384xf32>
    %67 = arith.select %65, %66, %62 : vector<1x384xi1>, vector<1x384xf32>
    %c0_24 = arith.constant 0 : index
    %c0_25 = arith.constant 0 : index
    %c0_26 = arith.constant 0 : index
    %68 = vector.load %arg6[%c0_24, %c0_25, %c0_26] : memref<1x1x384xf32, #tpu.memory_space<vmem>>, vector<1x1x384xf32>
    %69 = vector.shape_cast %68 : vector<1x1x384xf32> to vector<1x384xf32>
    %70 = vector.shape_cast %67 : vector<1x384xf32> to vector<1x1x384xf32>
    tpu.vector_store %arg6[%c0_24, %c0_25, %c0_26], %70 {strides = array<i32>} : memref<1x1x384xf32, #tpu.memory_space<vmem>>, vector<1x1x384xf32>,
    return
  }
  func.func @transform_0(%arg0: i32) -> (i32, i32) {
    %c0_i32 = arith.constant 0 : i32
    %c0_i32_0 = arith.constant 0 : i32
    return %arg0, %c0_i32 : i32, i32
  }
  func.func @transform_1(%arg0: i32) -> (i32, i32, i32) {
    %c0_i32 = arith.constant 0 : i32
    %c0_i32_0 = arith.constant 0 : i32
    %c0_i32_1 = arith.constant 0 : i32
    %c0_i32_2 = arith.constant 0 : i32
    return %c0_i32, %c0_i32_0, %c0_i32_1 : i32, i32, i32
  }
  func.func @transform_2(%arg0: i32) -> (i32, i32) {
    %c0_i32 = arith.constant 0 : i32
    %c0_i32_0 = arith.constant 0 : i32
    %c0_i32_1 = arith.constant 0 : i32
    return %c0_i32, %c0_i32_0 : i32, i32
  }
  func.func @transform_3(%arg0: i32) -> (i32, i32) {
    %c0_i32 = arith.constant 0 : i32
    %c0_i32_0 = arith.constant 0 : i32
    %c0_i32_1 = arith.constant 0 : i32
    return %c0_i32, %c0_i32_0 : i32, i32
  }
  func.func @transform_4(%arg0: i32) -> (i32, i32) {
    %c0_i32 = arith.constant 0 : i32
    %c0_i32_0 = arith.constant 0 : i32
    %c0_i32_1 = arith.constant 0 : i32
    return %c0_i32, %c0_i32_0 : i32, i32
  }
  func.func @transform_5(%arg0: i32) -> (i32, i32, i32) {
    %c0_i32 = arith.constant 0 : i32
    %c0_i32_0 = arith.constant 0 : i32
    %c0_i32_1 = arith.constant 0 : i32
    return %arg0, %c0_i32, %c0_i32_0 : i32, i32, i32
  }
}

</mosaic_0001>

<llo_original>
// kernel: tpu_custom_call.1
$region0: #{tpu_custom_call.1}
  #allocation0 [shape = 'u32[]', space=smem, size = 0x4, offset = 0x4, fixed_abs, tag = 'smem constant byte address 0x4 - core index']
  #allocation1 [shape = 'u32[144,128]{1,0:T(1,128)}', space=vmem, size = 0x12000, scoped, tag = 'internal scratch']
  #allocation2 [shape = 'f32[1,32]{1,0:T(1,128)}', space=vmem, size = 0x200, scoped, tag = 'scratch operand']
  %s0 = inlined_call_operand.hbm [shape: bf16[48,72], index: 0, kind: input, shape index: {}]
  %s1 = inlined_call_operand.hbm [shape: bf16[3,72,512], index: 1, kind: input, shape index: {}]
  %s2 = inlined_call_operand.hbm [shape: f32[1,512], index: 2, kind: input, shape index: {}]
  %s3 = inlined_call_operand.hbm [shape: bf16[32,384], index: 3, kind: input, shape index: {}]
  %s4 = inlined_call_operand.vmem [shape: f32[1,384], index: 4, kind: input, shape index: {}]
  %s5 = inlined_call_operand.hbm [shape: f32[2,1,384], index: 5, kind: output, shape index: {}]
  %s6 = sld [smem:[#allocation0]]
  $region69: #{tpu_custom_call.1} parent=0
    _
  %s8 = ssub.s32 1, %s6
  %s9 = scalar_select 0, %s8, %s6
  $region1: #{tpu_custom_call.1} parent=0
    #allocation3 [shape = 'u8[12288]{0}', space=vmem, size = 0x3000, scoped, tag = 'input window, operand 0']
    #allocation4 [shape = 's32[2]{0}', space=sflag, size = 0x8, scoped, tag = 'scoped memory for tpu_custom_call.1']
    #allocation5 [shape = 's32[2]{0}', space=sflag, size = 0x8, scoped, tag = 'scoped memory for tpu_custom_call.1']
    #allocation6 [shape = 'u8[221184]{0}', space=vmem, size = 0x36000, scoped, tag = 'input window, operand 1, single buffered']
    #allocation7 [shape = 's32[1]{0}', space=sflag, size = 0x4, scoped, tag = 'scoped memory for tpu_custom_call.1']
    #allocation8 [shape = 'u8[2048]{0}', space=vmem, size = 0x800, scoped, tag = 'input window, operand 2, single buffered']
    #allocation9 [shape = 'u8[24576]{0}', space=vmem, size = 0x6000, scoped, tag = 'input window, operand 3, single buffered']
    #allocation10 [shape = 's32[1]{0}', space=sflag, size = 0x4, scoped, tag = 'scoped memory for tpu_custom_call.1']
    #allocation11 [shape = 'u8[3072]{0}', space=vmem, size = 0xc00, scoped, tag = 'output window, operand 0']
    %10 = vsyncpa [#allocation4], 0
    %s11 = scalar_lea.sflag [#allocation4], 1
    %12 = vsyncpa %s11, 0
    %13 = vsyncpa [#allocation7], 0
    %14 = vsyncpa [#allocation10], 0
    %15 = vsyncpa [#allocation5], 0
    %s16 = scalar_lea.sflag [#allocation5], 1
    %17 = vsyncpa %s16, 0
    loop: start=0, step=1, limit=4
    $region2: #{tpu_custom_call.1} parent=1 // loop_pre_header
      _
    $region3: #{tpu_custom_call.1} parent=1 // loop_header
      %s19 = sphi 0, %s23
      %p20 = scmp.ge.s32.totalorder %s19, 4
      %s29 = sphi 0, %s31
      %s32 = sphi 0, %s29
      %s33 = sphi 0, %s32
      %s49 = sphi 0, %s33
      %s53 = sphi 0, %s53
      %s55 = sphi 0, %s53
      %s56 = sphi 0, %s55
      %s70 = sphi 0, %s56
      %s74 = sphi 0, %s74
      %s76 = sphi 0, %s74
      %s77 = sphi 0, %s76
      %s91 = sphi 0, %s77
      %s95 = sphi 0, %s95
      %s97 = sphi 0, %s95
      %s98 = sphi 0, %s97
      %s112 = sphi 0, %s98
      %s116 = sphi 0, %s116
      %s118 = sphi 0, %s116
      %s119 = sphi 0, %s118
      %s133 = sphi 0, %s119
      %s139 = sphi 0, %s141
      %s142 = sphi 0, %s139
      %s143 = sphi 0, %s142
      %s159 = sphi 0, %s143
    $region4: #{tpu_custom_call.1} parent=1 // loop_header_branch
      %22 = sbr.rel (%p20) target = $region8
    $region5: #{tpu_custom_call.1} parent=1 // loop_body
      %s24 = ssub.s32 %s19, 1
      %s25 = ssub.s32 %s19, 2
      %s26 = sadd.s32 %s19, 1
      %s27 = ssub.s32 %s19, %s26
      %p28 = scmp.eq.s32.totalorder %s27, 0
      %s30 = sadd.s32 %s29, 1
      %s31 = scalar_select %p28, %s29, %s30
      %p34 = pneg %p28
      %p35 = scmp.eq.s32.totalorder %s19, 1
      %p36 = por %p34, %p35
      %p37 = scmp.ne.s32.totalorder %s29, %s32
      %p38 = scmp.eq.s32.totalorder %s19, 0
      %p39 = por %p37, %p38
      %p40 = scmp.ne.s32.totalorder %s29, %s32
      %p41 = scmp.eq.s32.totalorder %s24, 1
      %p42 = por %p40, %p41
      %p43 = scmp.ne.s32.totalorder %s32, %s33
      %p44 = scmp.eq.s32.totalorder %s24, 0
      %p45 = por %p43, %p44
      %p46 = scmp.ne.s32.totalorder %s32, %s33
      %p47 = scmp.eq.s32.totalorder %s25, 1
      %p48 = por %p46, %p47
      %p50 = scmp.ne.s32.totalorder %s33, %s49
      %p51 = scmp.eq.s32.totalorder %s25, 0
      %p52 = por %p50, %p51
      %s54 = sadd.s32 %s53, 1
      %p57 = scmp.eq.s32.totalorder %s19, 1
      %p58 = scmp.ne.s32.totalorder %s53, %s55
      %p59 = scmp.eq.s32.totalorder %s19, 0
      %p60 = por %p58, %p59
      %p61 = scmp.ne.s32.totalorder %s53, %s55
      %p62 = scmp.eq.s32.totalorder %s24, 1
      %p63 = por %p61, %p62
      %p64 = scmp.ne.s32.totalorder %s55, %s56
      %p65 = scmp.eq.s32.totalorder %s24, 0
      %p66 = por %p64, %p65
      %p67 = scmp.ne.s32.totalorder %s55, %s56
      %p68 = scmp.eq.s32.totalorder %s25, 1
      %p69 = por %p67, %p68
      %p71 = scmp.ne.s32.totalorder %s56, %s70
      %p72 = scmp.eq.s32.totalorder %s25, 0
      %p73 = por %p71, %p72
      %s75 = sadd.s32 %s74, 1
      %p78 = scmp.eq.s32.totalorder %s19, 1
      %p79 = scmp.ne.s32.totalorder %s74, %s76
      %p80 = scmp.eq.s32.totalorder %s19, 0
      %p81 = por %p79, %p80
      %p82 = scmp.ne.s32.totalorder %s74, %s76
      %p83 = scmp.eq.s32.totalorder %s24, 1
      %p84 = por %p82, %p83
      %p85 = scmp.ne.s32.totalorder %s76, %s77
      %p86 = scmp.eq.s32.totalorder %s24, 0
      %p87 = por %p85, %p86
      %p88 = scmp.ne.s32.totalorder %s76, %s77
      %p89 = scmp.eq.s32.totalorder %s25, 1
      %p90 = por %p88, %p89
      %p92 = scmp.ne.s32.totalorder %s77, %s91
      %p93 = scmp.eq.s32.totalorder %s25, 0
      %p94 = por %p92, %p93
      %s96 = sadd.s32 %s95, 1
      %p99 = scmp.eq.s32.totalorder %s19, 1
      %p100 = scmp.ne.s32.totalorder %s95, %s97
      %p101 = scmp.eq.s32.totalorder %s19, 0
      %p102 = por %p100, %p101
      %p103 = scmp.ne.s32.totalorder %s95, %s97
      %p104 = scmp.eq.s32.totalorder %s24, 1
      %p105 = por %p103, %p104
      %p106 = scmp.ne.s32.totalorder %s97, %s98
      %p107 = scmp.eq.s32.totalorder %s24, 0
      %p108 = por %p106, %p107
      %p109 = scmp.ne.s32.totalorder %s97, %s98
      %p110 = scmp.eq.s32.totalorder %s25, 1
      %p111 = por %p109, %p110
      %p113 = scmp.ne.s32.totalorder %s98, %s112
      %p114 = scmp.eq.s32.totalorder %s25, 0
      %p115 = por %p113, %p114
      %s117 = sadd.s32 %s116, 1
      %p120 = scmp.eq.s32.totalorder %s19, 1
      %p121 = scmp.ne.s32.totalorder %s116, %s118
      %p122 = scmp.eq.s32.totalorder %s19, 0
      %p123 = por %p121, %p122
      %p124 = scmp.ne.s32.totalorder %s116, %s118
      %p125 = scmp.eq.s32.totalorder %s24, 1
      %p126 = por %p124, %p125
      %p127 = scmp.ne.s32.totalorder %s118, %s119
      %p128 = scmp.eq.s32.totalorder %s24, 0
      %p129 = por %p127, %p128
      %p130 = scmp.ne.s32.totalorder %s118, %s119
      %p131 = scmp.eq.s32.totalorder %s25, 1
      %p132 = por %p130, %p131
      %p134 = scmp.ne.s32.totalorder %s119, %s133
      %p135 = scmp.eq.s32.totalorder %s25, 0
      %p136 = por %p134, %p135
      %s137 = ssub.s32 %s19, %s26
      %p138 = scmp.eq.s32.totalorder %s137, 0
      %s140 = sadd.s32 %s139, 1
      %s141 = scalar_select %p138, %s139, %s140
      %p144 = pneg %p138
      %p145 = scmp.eq.s32.totalorder %s19, 1
      %p146 = por %p144, %p145
      %p147 = scmp.ne.s32.totalorder %s139, %s142
      %p148 = scmp.eq.s32.totalorder %s19, 0
      %p149 = por %p147, %p148
      %p150 = scmp.ne.s32.totalorder %s139, %s142
      %p151 = scmp.eq.s32.totalorder %s24, 1
      %p152 = por %p150, %p151
      %p153 = scmp.ne.s32.totalorder %s142, %s143
      %p154 = scmp.eq.s32.totalorder %s24, 0
      %p155 = por %p153, %p154
      %p156 = scmp.ne.s32.totalorder %s142, %s143
      %p157 = scmp.eq.s32.totalorder %s25, 1
      %p158 = por %p156, %p157
      %p160 = scmp.ne.s32.totalorder %s143, %s159
      %p161 = scmp.eq.s32.totalorder %s25, 0
      %p162 = por %p160, %p161
      %p163 = scmp.le.s32.totalorder 1, %s19
      %p164 = scmp.lt.s32.totalorder %s19, 3
      %p165 = pnand %p163, %p164
      %p166 = pneg %p165
      // Predicated region
      $region9: #{tpu_custom_call.1} parent=5 // pred_check
        _
      $region10: #{tpu_custom_call.1} parent=5 // pred_check_branch
        %168 = sbr.rel (%p165) target = $region12
      $region11: #{tpu_custom_call.1} parent=5 // pred_region
        %s169 = ssub.s32 %s19, 1
        // Predicated region
        $region13: #{tpu_custom_call.1} parent=11 // pred_check
          %p170 = pneg %p66
        $region14: #{tpu_custom_call.1} parent=11 // pred_check_branch
          %172 = sbr.rel (%p170) target = $region16
        $region15: #{tpu_custom_call.1} parent=11 // pred_region
          %s174 = ssub.s32 6912, 6912
          %175 = vsyncadd [#allocation7], %s174
          %s176 = sshll.u32 [#allocation6], 4
          %s177 = int_to_ptr.vmem [resolvable:$true] %s176
          %182 = dma.hbm_to_vmem [thread:$0]  %s1, 6912, %s177, [#allocation7], 256, 256, 16
        $region16: #{tpu_custom_call.1} parent=11 // pred_fallthru
          _
        // Predicated region
        $region17: #{tpu_custom_call.1} parent=11 // pred_check
          %p183 = pneg %p87
        $region18: #{tpu_custom_call.1} parent=11 // pred_check_branch
          %185 = sbr.rel (%p183) target = $region20
        $region19: #{tpu_custom_call.1} parent=11 // pred_region
          %s187 = ssub.s32 64, 64
          %188 = vsyncadd [#allocation7], %s187
          %s190 = sshll.u32 [#allocation8], 4
          %s191 = int_to_ptr.vmem [resolvable:$true] %s190
          %193 = dma.hbm_to_vmem [thread:$0]  %s2, 64, %s191, [#allocation7]
        $region20: #{tpu_custom_call.1} parent=11 // pred_fallthru
          _
        // Predicated region
        $region21: #{tpu_custom_call.1} parent=11 // pred_check
          %p194 = pneg %p108
        $region22: #{tpu_custom_call.1} parent=11 // pred_check_branch
          %196 = sbr.rel (%p194) target = $region24
        $region23: #{tpu_custom_call.1} parent=11 // pred_region
          %s198 = ssub.s32 768, 768
          %199 = vsyncadd [#allocation10], %s198
          %s200 = sshll.u32 [#allocation9], 4
          %s201 = int_to_ptr.vmem [resolvable:$true] %s200
          %206 = dma.hbm_to_vmem [thread:$0]  %s3, 768, %s201, [#allocation10], 192, 192, 12
        $region24: #{tpu_custom_call.1} parent=11 // pred_fallthru
          _
        // Predicated region
        $region25: #{tpu_custom_call.1} parent=11 // pred_check
          %p207 = pneg %p129
        $region26: #{tpu_custom_call.1} parent=11 // pred_check_branch
          %209 = sbr.rel (%p207) target = $region28
        $region27: #{tpu_custom_call.1} parent=11 // pred_region
          _
        $region28: #{tpu_custom_call.1} parent=11 // pred_fallthru
          _
      $region12: #{tpu_custom_call.1} parent=5 // pred_fallthru
        _
      %p210 = scmp.lt.s32.totalorder %s19, 2
      // Predicated region
      $region29: #{tpu_custom_call.1} parent=5 // pred_check
        %p211 = pneg %p210
      $region30: #{tpu_custom_call.1} parent=5 // pred_check_branch
        %213 = sbr.rel (%p211) target = $region32
      $region31: #{tpu_custom_call.1} parent=5 // pred_region
        // Predicated region
        $region33: #{tpu_custom_call.1} parent=31 // pred_check
          %p214 = pneg %p39
        $region34: #{tpu_custom_call.1} parent=31 // pred_check_branch
          %216 = sbr.rel (%p214) target = $region36
        $region35: #{tpu_custom_call.1} parent=31 // pred_region
          %s217 = sand.u32 %s29, 1
          %s218 = scalar_lea.sflag [#allocation4], %s217
          %s219 = sand.u32 %s29, 1
          %s220 = smul.addr %s219, 12
          %s221 = scalar_lea.vmem [#allocation3], %s220
          %s222 = smul.u32 3, %s19
          %s224 = ssub.s32 192, 192
          %225 = vsyncadd %s218, %s224
          %s226 = smul.addr %s222, 64
          %s227 = scalar_lea.hbm %s0, %s226
          %s228 = sshll.u32 %s221, 4
          %s229 = int_to_ptr.vmem [resolvable:$true] %s228
          %234 = dma.hbm_to_vmem [thread:$0]  %s227, 192, %s229, %s218, 64, 64, 4
        $region36: #{tpu_custom_call.1} parent=31 // pred_fallthru
          _
      $region32: #{tpu_custom_call.1} parent=5 // pred_fallthru
        _
      %p235 = scmp.le.s32.totalorder 1, %s19
      %p236 = scmp.lt.s32.totalorder %s19, 3
      %p237 = pnand %p235, %p236
      %p238 = pneg %p237
      // Predicated region
      $region37: #{tpu_custom_call.1} parent=5 // pred_check
        _
      $region38: #{tpu_custom_call.1} parent=5 // pred_check_branch
        %240 = sbr.rel (%p237) target = $region40
      $region39: #{tpu_custom_call.1} parent=5 // pred_region
        %s241 = ssub.s32 %s19, 1
        %s242 = sand.u32 %s32, 1
        %s243 = scalar_lea.sflag [#allocation4], %s242
        %s244 = sand.u32 %s32, 1
        %s245 = smul.addr %s244, 12
        %s246 = scalar_lea.vmem [#allocation3], %s245
        // Predicated region
        $region41: #{tpu_custom_call.1} parent=39 // pred_check
          %p247 = pneg %p45
        $region42: #{tpu_custom_call.1} parent=39 // pred_check_branch
          %249 = sbr.rel (%p247) target = $region44
        $region43: #{tpu_custom_call.1} parent=39 // pred_region
          %250 = dma.done %s243, 192
        $region44: #{tpu_custom_call.1} parent=39 // pred_fallthru
          _
        // Predicated region
        $region45: #{tpu_custom_call.1} parent=39 // pred_check
          %p251 = pneg %p66
        $region46: #{tpu_custom_call.1} parent=39 // pred_check_branch
          %253 = sbr.rel (%p251) target = $region48
        $region47: #{tpu_custom_call.1} parent=39 // pred_region
          %254 = dma.done [#allocation7], 6912
        $region48: #{tpu_custom_call.1} parent=39 // pred_fallthru
          _
        // Predicated region
        $region49: #{tpu_custom_call.1} parent=39 // pred_check
          %p255 = pneg %p87
        $region50: #{tpu_custom_call.1} parent=39 // pred_check_branch
          %257 = sbr.rel (%p255) target = $region52
        $region51: #{tpu_custom_call.1} parent=39 // pred_region
          %258 = dma.done [#allocation7], 64
        $region52: #{tpu_custom_call.1} parent=39 // pred_fallthru
          _
        // Predicated region
        $region53: #{tpu_custom_call.1} parent=39 // pred_check
          %p259 = pneg %p108
        $region54: #{tpu_custom_call.1} parent=39 // pred_check_branch
          %261 = sbr.rel (%p259) target = $region56
        $region55: #{tpu_custom_call.1} parent=39 // pred_region
          %262 = dma.done [#allocation10], 768
        $region56: #{tpu_custom_call.1} parent=39 // pred_fallthru
          _
        %s263 = sand.u32 %s32, 1
        %s264 = scalar_lea.sflag [#allocation4], %s263
        %s265 = sand.u32 %s32, 1
        %s266 = smul.addr %s265, 12
        %s267 = scalar_lea.vmem [#allocation3], %s266
        %p268 = pneg %p45
        %p269 = pneg %p42
        %p270 = pneg %p66
        %p271 = pneg %p63
        %p272 = pneg %p87
        %p273 = pneg %p84
        %p274 = pneg %p108
        %p275 = pneg %p105
        %p276 = pneg %p129
        %p277 = pneg %p126
        %p278 = pneg %p155
        %p279 = pneg %p152
        %s280 = sand.u32 %s142, 1
        %s281 = scalar_lea.sflag [#allocation5], %s280
        %s282 = sand.u32 %s142, 1
        %s283 = smul.addr %s282, 3
        %s284 = scalar_lea.vmem [#allocation11], %s283
        %s285 = smul.u32 3, %s24
        %v287 = vld [vmem:[%s246] sm:$0xf]
        %v288 = vld [vmem:[%s246 + $0x4] sm:$0xf]
        %v289 = vld [vmem:[%s246 + $0x8] sm:$0xf]
        %v290 = vld [vmem:[#allocation6] sm:$0xff]
        %v291 = vld [vmem:[#allocation6 + $0x8] sm:$0xff]
        %v292 = vld [vmem:[#allocation6 + $0x10] sm:$0xff]
        %v293 = vld [vmem:[#allocation6 + $0x18] sm:$0xff]
        %v294 = vld [vmem:[#allocation6 + $0x20] sm:$0xff]
        %v295 = vld [vmem:[#allocation6 + $0x28] sm:$0xff]
        %v296 = vld [vmem:[#allocation6 + $0x30] sm:$0xff]
        %v297 = vld [vmem:[#allocation6 + $0x38] sm:$0xff]
        %v298 = vld [vmem:[#allocation6 + $0x40] sm:$0xff]
        %v299 = vld [vmem:[#allocation6 + $0x48] sm:$0xff]
        %v300 = vld [vmem:[#allocation6 + $0x50] sm:$0xff]
        %v301 = vld [vmem:[#allocation6 + $0x58] sm:$0xff]
        %v302 = vld [vmem:[#allocation6 + $0x60] sm:$0xff]
        %v303 = vld [vmem:[#allocation6 + $0x68] sm:$0xff]
        %v304 = vld [vmem:[#allocation6 + $0x70] sm:$0xff]
        %v305 = vld [vmem:[#allocation6 + $0x78] sm:$0xff]
        %v306 = vld [vmem:[#allocation6 + $0x80] sm:$0xff]
        %v307 = vld [vmem:[#allocation6 + $0x88] sm:$0xff]
        %v311 = vunpack.c.l.b16 %v287
        %v312 = vunpack.c.l.b16 %v288
        %v313 = vunpack.c.l.b16 %v289
        %v314 = vpack.c.b16 %v312, %v311
        %v315 = vpack.c.b16 %v313, %v313
        %v334 = vunpack.c.l.b16 %v290
        %v335 = vunpack.c.h.b16 %v290
        %v336 = vunpack.c.l.b16 %v291
        %v337 = vunpack.c.h.b16 %v291
        %v338 = vunpack.c.l.b16 %v292
        %v339 = vunpack.c.h.b16 %v292
        %v340 = vunpack.c.l.b16 %v293
        %v341 = vunpack.c.h.b16 %v293
        %v342 = vunpack.c.l.b16 %v294
        %v343 = vunpack.c.h.b16 %v294
        %v344 = vunpack.c.l.b16 %v295
        %v345 = vunpack.c.h.b16 %v295
        %v346 = vunpack.c.l.b16 %v296
        %v347 = vunpack.c.h.b16 %v296
        %v348 = vunpack.c.l.b16 %v297
        %v349 = vunpack.c.h.b16 %v297
        %v350 = vunpack.c.l.b16 %v298
        %v351 = vunpack.c.h.b16 %v298
        %v352 = vunpack.c.l.b16 %v299
        %v353 = vunpack.c.h.b16 %v299
        %v354 = vunpack.c.l.b16 %v300
        %v355 = vunpack.c.h.b16 %v300
        %v356 = vunpack.c.l.b16 %v301
        %v357 = vunpack.c.h.b16 %v301
        %v358 = vunpack.c.l.b16 %v302
        %v359 = vunpack.c.h.b16 %v302
        %v360 = vunpack.c.l.b16 %v303
        %v361 = vunpack.c.h.b16 %v303
        %v362 = vunpack.c.l.b16 %v304
        %v363 = vunpack.c.h.b16 %v304
        %v364 = vunpack.c.l.b16 %v305
        %v365 = vunpack.c.h.b16 %v305
        %v366 = vunpack.c.l.b16 %v306
        %v367 = vunpack.c.h.b16 %v306
        %v368 = vunpack.c.l.b16 %v307
        %v369 = vunpack.c.h.b16 %v307
        %v370 = vpack.c.b16 %v338, %v334
        %v371 = vpack.c.b16 %v339, %v335
        %v372 = vpack.c.b16 %v340, %v336
        %v373 = vpack.c.b16 %v341, %v337
        %v374 = vpack.c.b16 %v346, %v342
        %v375 = vpack.c.b16 %v347, %v343
        %v376 = vpack.c.b16 %v348, %v344
        %v377 = vpack.c.b16 %v349, %v345
        %v378 = vpack.c.b16 %v354, %v350
        %v379 = vpack.c.b16 %v355, %v351
        %v380 = vpack.c.b16 %v356, %v352
        %v381 = vpack.c.b16 %v357, %v353
        %v382 = vpack.c.b16 %v362, %v358
        %v383 = vpack.c.b16 %v363, %v359
        %v384 = vpack.c.b16 %v364, %v360
        %v385 = vpack.c.b16 %v365, %v361
        %v386 = vpack.c.b16 %v366, %v366
        %v387 = vpack.c.b16 %v367, %v367
        %v388 = vpack.c.b16 %v368, %v368
        %v389 = vpack.c.b16 %v369, %v369
        %vm406 = vcmask 588800
        %v408 = vsel %vm406, %v314, 0
        %v411 = vsel %vm406, %v315, 0
        %vm413 = vcmask 1043456
        %v415 = vsel %vm413, %v386, 0
        %v418 = vsel %vm413, %v387, 0
        %v421 = vsel %vm413, %v388, 0
        %v424 = vsel %vm413, %v389, 0
        %426 = vmatprep.subr.bf16.mxu0 0
        %427 = vmatpush1.bf16.msra.mxu0 0
        %428 = vmatprep.subr.bf16.mxu0 0
        %429 = vmatpush1.bf16.msra.mxu0 0
        %430 = vmatprep.subr.bf16.mxu0 0
        %431 = vmatpush1.bf16.msra.mxu0 0
        %432 = vmatprep.subr.bf16.mxu0 %v418
        %433 = vmatpush1.bf16.msra.mxu0 %v415
        %434 = vmatprep.subr.bf16.mxu0 %v383
        %435 = vmatpush1.bf16.msra.mxu0 %v382
        %436 = vmatprep.subr.bf16.mxu0 %v379
        %437 = vmatpush1.bf16.msra.mxu0 %v378
        %438 = vmatprep.subr.bf16.mxu0 %v375
        %439 = vmatpush1.bf16.msra.mxu0 %v374
        %440 = vmatprep.subr.bf16.mxu0 %v371
        %441 = vmatpush1.bf16.msra.mxu0 %v370
        %442 = vmatprep.subr.bf16.mxu0 0
        %443 = vmatpush2.bf16.msra.mxu0 0
        %444 = vmatprep.subr.bf16.mxu0 0
        %445 = vmatpush2.bf16.msra.mxu0 0
        %446 = vmatprep.subr.bf16.mxu0 0
        %447 = vmatpush2.bf16.msra.mxu0 0
        %448 = vmatprep.subr.bf16.mxu0 0
        %449 = vmatpush2.bf16.msra.mxu0 0
        %450 = vmatprep.subr.bf16.mxu0 0
        %451 = vmatpush2.bf16.msra.mxu0 0
        %452 = vmatprep.subr.bf16.mxu0 0
        %453 = vmatpush2.bf16.msra.mxu0 0
        %454 = vmatprep.subr.bf16.mxu0 0
        %455 = vmatpush2.bf16.msra.mxu0 0
        %456 = vmatprep.subr.bf16.mxu0 0
        %457 = vmatpush2.bf16.msra.mxu0 0
        %458 = vmatprep.mubr.bf16.mxu0 0
        %459 = vmatmul.mubr.bf16.gmra.mxu0 %v408
        %v460 = vpop.f32.mrf.mxu0
        %v461 = vadd.f32 0.0, %v460
        %v462 = vpop.f32.mrf.mxu0
        %v463 = vadd.f32 0.0, %v462
        %v464 = vpop.f32.mrf.mxu0
        %v465 = vadd.f32 0.0, %v464
        %v466 = vpop.f32.mrf.mxu0
        %v467 = vadd.f32 0.0, %v466
        %468 = vmatprep.mubr.bf16.mxu0 0
        %469 = vmatmul.mubr.bf16.gmra.mxu0 %v411
        %v470 = vpop.f32.mrf.mxu0
        %v471 = vpop.f32.mrf.mxu0
        %v472 = vpop.f32.mrf.mxu0
        %v473 = vpop.f32.mrf.mxu0
        %474 = vdwg.mxu0
        %475 = vmatprep.subr.bf16.mxu0 0
        %476 = vmatpush1.bf16.msra.mxu0 0
        %477 = vmatprep.subr.bf16.mxu0 0
        %478 = vmatpush1.bf16.msra.mxu0 0
        %479 = vmatprep.subr.bf16.mxu0 0
        %480 = vmatpush1.bf16.msra.mxu0 0
        %481 = vmatprep.subr.bf16.mxu0 %v424
        %482 = vmatpush1.bf16.msra.mxu0 %v421
        %483 = vmatprep.subr.bf16.mxu0 %v385
        %484 = vmatpush1.bf16.msra.mxu0 %v384
        %485 = vmatprep.subr.bf16.mxu0 %v381
        %486 = vmatpush1.bf16.msra.mxu0 %v380
        %487 = vmatprep.subr.bf16.mxu0 %v377
        %488 = vmatpush1.bf16.msra.mxu0 %v376
        %489 = vmatprep.subr.bf16.mxu0 %v373
        %490 = vmatpush1.bf16.msra.mxu0 %v372
        %491 = vmatprep.subr.bf16.mxu0 0
        %492 = vmatpush2.bf16.msra.mxu0 0
        %493 = vmatprep.subr.bf16.mxu0 0
        %494 = vmatpush2.bf16.msra.mxu0 0
        %495 = vmatprep.subr.bf16.mxu0 0
        %496 = vmatpush2.bf16.msra.mxu0 0
        %497 = vmatprep.subr.bf16.mxu0 0
        %498 = vmatpush2.bf16.msra.mxu0 0
        %499 = vmatprep.subr.bf16.mxu0 0
        %500 = vmatpush2.bf16.msra.mxu0 0
        %501 = vmatprep.subr.bf16.mxu0 0
        %502 = vmatpush2.bf16.msra.mxu0 0
        %503 = vmatprep.subr.bf16.mxu0 0
        %504 = vmatpush2.bf16.msra.mxu0 0
        %505 = vmatprep.subr.bf16.mxu0 0
        %506 = vmatpush2.bf16.msra.mxu0 0
        %507 = vmatprep.mubr.bf16.mxu0 0
        %508 = vmatmul.mubr.bf16.gmra.mxu0 %v408
        %v509 = vpop.f32.mrf.mxu0
        %v510 = vadd.f32 0.0, %v509
        %v511 = vpop.f32.mrf.mxu0
        %v512 = vadd.f32 0.0, %v511
        %v513 = vpop.f32.mrf.mxu0
        %v514 = vadd.f32 0.0, %v513
        %v515 = vpop.f32.mrf.mxu0
        %v516 = vadd.f32 0.0, %v515
        %517 = vmatprep.mubr.bf16.mxu0 0
        %518 = vmatmul.mubr.bf16.gmra.mxu0 %v411
        %v519 = vpop.f32.mrf.mxu0
        %v520 = vpop.f32.mrf.mxu0
        %v521 = vpop.f32.mrf.mxu0
        %v522 = vpop.f32.mrf.mxu0
        %523 = vdwg.mxu0
        %s524 = scalar_lea.vmem [#allocation6], 144
        %v525 = vld [vmem:[%s524] sm:$0xff]
        %v526 = vld [vmem:[%s524 + $0x8] sm:$0xff]
        %v527 = vld [vmem:[%s524 + $0x10] sm:$0xff]
        %v528 = vld [vmem:[%s524 + $0x18] sm:$0xff]
        %v529 = vld [vmem:[%s524 + $0x20] sm:$0xff]
        %v530 = vld [vmem:[%s524 + $0x28] sm:$0xff]
        %v531 = vld [vmem:[%s524 + $0x30] sm:$0xff]
        %v532 = vld [vmem:[%s524 + $0x38] sm:$0xff]
        %v533 = vld [vmem:[%s524 + $0x40] sm:$0xff]
        %v534 = vld [vmem:[%s524 + $0x48] sm:$0xff]
        %v535 = vld [vmem:[%s524 + $0x50] sm:$0xff]
        %v536 = vld [vmem:[%s524 + $0x58] sm:$0xff]
        %v537 = vld [vmem:[%s524 + $0x60] sm:$0xff]
        %v538 = vld [vmem:[%s524 + $0x68] sm:$0xff]
        %v539 = vld [vmem:[%s524 + $0x70] sm:$0xff]
        %v540 = vld [vmem:[%s524 + $0x78] sm:$0xff]
        %v541 = vld [vmem:[%s524 + $0x80] sm:$0xff]
        %v542 = vld [vmem:[%s524 + $0x88] sm:$0xff]
        %v561 = vunpack.c.l.b16 %v525
        %v562 = vunpack.c.h.b16 %v525
        %v563 = vunpack.c.l.b16 %v526
        %v564 = vunpack.c.h.b16 %v526
        %v565 = vunpack.c.l.b16 %v527
        %v566 = vunpack.c.h.b16 %v527
        %v567 = vunpack.c.l.b16 %v528
        %v568 = vunpack.c.h.b16 %v528
        %v569 = vunpack.c.l.b16 %v529
        %v570 = vunpack.c.h.b16 %v529
        %v571 = vunpack.c.l.b16 %v530
        %v572 = vunpack.c.h.b16 %v530
        %v573 = vunpack.c.l.b16 %v531
        %v574 = vunpack.c.h.b16 %v531
        %v575 = vunpack.c.l.b16 %v532
        %v576 = vunpack.c.h.b16 %v532
        %v577 = vunpack.c.l.b16 %v533
        %v578 = vunpack.c.h.b16 %v533
        %v579 = vunpack.c.l.b16 %v534
        %v580 = vunpack.c.h.b16 %v534
        %v581 = vunpack.c.l.b16 %v535
        %v582 = vunpack.c.h.b16 %v535
        %v583 = vunpack.c.l.b16 %v536
        %v584 = vunpack.c.h.b16 %v536
        %v585 = vunpack.c.l.b16 %v537
        %v586 = vunpack.c.h.b16 %v537
        %v587 = vunpack.c.l.b16 %v538
        %v588 = vunpack.c.h.b16 %v538
        %v589 = vunpack.c.l.b16 %v539
        %v590 = vunpack.c.h.b16 %v539
        %v591 = vunpack.c.l.b16 %v540
        %v592 = vunpack.c.h.b16 %v540
        %v593 = vunpack.c.l.b16 %v541
        %v594 = vunpack.c.h.b16 %v541
        %v595 = vunpack.c.l.b16 %v542
        %v596 = vunpack.c.h.b16 %v542
        %v597 = vpack.c.b16 %v565, %v561
        %v598 = vpack.c.b16 %v566, %v562
        %v599 = vpack.c.b16 %v567, %v563
        %v600 = vpack.c.b16 %v568, %v564
        %v601 = vpack.c.b16 %v573, %v569
        %v602 = vpack.c.b16 %v574, %v570
        %v603 = vpack.c.b16 %v575, %v571
        %v604 = vpack.c.b16 %v576, %v572
        %v605 = vpack.c.b16 %v581, %v577
        %v606 = vpack.c.b16 %v582, %v578
        %v607 = vpack.c.b16 %v583, %v579
        %v608 = vpack.c.b16 %v584, %v580
        %v609 = vpack.c.b16 %v589, %v585
        %v610 = vpack.c.b16 %v590, %v586
        %v611 = vpack.c.b16 %v591, %v587
        %v612 = vpack.c.b16 %v592, %v588
        %v613 = vpack.c.b16 %v593, %v593
        %v614 = vpack.c.b16 %v594, %v594
        %v615 = vpack.c.b16 %v595, %v595
        %v616 = vpack.c.b16 %v596, %v596
        %v634 = vsel %vm413, %v613, 0
        %v637 = vsel %vm413, %v614, 0
        %v640 = vsel %vm413, %v615, 0
        %v643 = vsel %vm413, %v616, 0
        %645 = vmatprep.subr.bf16.mxu0 0
        %646 = vmatpush1.bf16.msra.mxu0 0
        %647 = vmatprep.subr.bf16.mxu0 0
        %648 = vmatpush1.bf16.msra.mxu0 0
        %649 = vmatprep.subr.bf16.mxu0 0
        %650 = vmatpush1.bf16.msra.mxu0 0
        %651 = vmatprep.subr.bf16.mxu0 %v637
        %652 = vmatpush1.bf16.msra.mxu0 %v634
        %653 = vmatprep.subr.bf16.mxu0 %v610
        %654 = vmatpush1.bf16.msra.mxu0 %v609
        %655 = vmatprep.subr.bf16.mxu0 %v606
        %656 = vmatpush1.bf16.msra.mxu0 %v605
        %657 = vmatprep.subr.bf16.mxu0 %v602
        %658 = vmatpush1.bf16.msra.mxu0 %v601
        %659 = vmatprep.subr.bf16.mxu0 %v598
        %660 = vmatpush1.bf16.msra.mxu0 %v597
        %661 = vmatprep.subr.bf16.mxu0 0
        %662 = vmatpush2.bf16.msra.mxu0 0
        %663 = vmatprep.subr.bf16.mxu0 0
        %664 = vmatpush2.bf16.msra.mxu0 0
        %665 = vmatprep.subr.bf16.mxu0 0
        %666 = vmatpush2.bf16.msra.mxu0 0
        %667 = vmatprep.subr.bf16.mxu0 0
        %668 = vmatpush2.bf16.msra.mxu0 0
        %669 = vmatprep.subr.bf16.mxu0 0
        %670 = vmatpush2.bf16.msra.mxu0 0
        %671 = vmatprep.subr.bf16.mxu0 0
        %672 = vmatpush2.bf16.msra.mxu0 0
        %673 = vmatprep.subr.bf16.mxu0 0
        %674 = vmatpush2.bf16.msra.mxu0 0
        %675 = vmatprep.subr.bf16.mxu0 0
        %676 = vmatpush2.bf16.msra.mxu0 0
        %677 = vmatprep.mubr.bf16.mxu0 0
        %678 = vmatmul.mubr.bf16.gmra.mxu0 %v408
        %v679 = vpop.f32.mrf.mxu0
        %v680 = vadd.f32 0.0, %v679
        %v681 = vpop.f32.mrf.mxu0
        %v682 = vadd.f32 0.0, %v681
        %v683 = vpop.f32.mrf.mxu0
        %v684 = vadd.f32 0.0, %v683
        %v685 = vpop.f32.mrf.mxu0
        %v686 = vadd.f32 0.0, %v685
        %687 = vmatprep.mubr.bf16.mxu0 0
        %688 = vmatmul.mubr.bf16.gmra.mxu0 %v411
        %v689 = vpop.f32.mrf.mxu0
        %v690 = vadd.f32 0.0, %v689
        %v691 = vpop.f32.mrf.mxu0
        %v692 = vadd.f32 0.0, %v691
        %v693 = vpop.f32.mrf.mxu0
        %v694 = vpop.f32.mrf.mxu0
        %695 = vdwg.mxu0
        %696 = vmatprep.subr.bf16.mxu0 0
        %697 = vmatpush1.bf16.msra.mxu0 0
        %698 = vmatprep.subr.bf16.mxu0 0
        %699 = vmatpush1.bf16.msra.mxu0 0
        %700 = vmatprep.subr.bf16.mxu0 0
        %701 = vmatpush1.bf16.msra.mxu0 0
        %702 = vmatprep.subr.bf16.mxu0 %v643
        %703 = vmatpush1.bf16.msra.mxu0 %v640
        %704 = vmatprep.subr.bf16.mxu0 %v612
        %705 = vmatpush1.bf16.msra.mxu0 %v611
        %706 = vmatprep.subr.bf16.mxu0 %v608
        %707 = vmatpush1.bf16.msra.mxu0 %v607
        %708 = vmatprep.subr.bf16.mxu0 %v604
        %709 = vmatpush1.bf16.msra.mxu0 %v603
        %710 = vmatprep.subr.bf16.mxu0 %v600
        %711 = vmatpush1.bf16.msra.mxu0 %v599
        %712 = vmatprep.subr.bf16.mxu0 0
        %713 = vmatpush2.bf16.msra.mxu0 0
        %714 = vmatprep.subr.bf16.mxu0 0
        %715 = vmatpush2.bf16.msra.mxu0 0
        %716 = vmatprep.subr.bf16.mxu0 0
        %717 = vmatpush2.bf16.msra.mxu0 0
        %718 = vmatprep.subr.bf16.mxu0 0
        %719 = vmatpush2.bf16.msra.mxu0 0
        %720 = vmatprep.subr.bf16.mxu0 0
        %721 = vmatpush2.bf16.msra.mxu0 0
        %722 = vmatprep.subr.bf16.mxu0 0
        %723 = vmatpush2.bf16.msra.mxu0 0
        %724 = vmatprep.subr.bf16.mxu0 0
        %725 = vmatpush2.bf16.msra.mxu0 0
        %726 = vmatprep.subr.bf16.mxu0 0
        %727 = vmatpush2.bf16.msra.mxu0 0
        %728 = vmatprep.mubr.bf16.mxu0 0
        %729 = vmatmul.mubr.bf16.gmra.mxu0 %v408
        %v730 = vpop.f32.mrf.mxu0
        %v731 = vadd.f32 0.0, %v730
        %v732 = vpop.f32.mrf.mxu0
        %v733 = vadd.f32 0.0, %v732
        %v734 = vpop.f32.mrf.mxu0
        %v735 = vadd.f32 0.0, %v734
        %v736 = vpop.f32.mrf.mxu0
        %v737 = vadd.f32 0.0, %v736
        %738 = vmatprep.mubr.bf16.mxu0 0
        %739 = vmatmul.mubr.bf16.gmra.mxu0 %v411
        %v740 = vpop.f32.mrf.mxu0
        %v741 = vadd.f32 0.0, %v740
        %v742 = vpop.f32.mrf.mxu0
        %v743 = vadd.f32 0.0, %v742
        %v744 = vpop.f32.mrf.mxu0
        %v745 = vpop.f32.mrf.mxu0
        %746 = vdwg.mxu0
        %s747 = scalar_lea.vmem [#allocation6], 288
        %v748 = vld [vmem:[%s747] sm:$0xff]
        %v749 = vld [vmem:[%s747 + $0x8] sm:$0xff]
        %v750 = vld [vmem:[%s747 + $0x10] sm:$0xff]
        %v751 = vld [vmem:[%s747 + $0x18] sm:$0xff]
        %v752 = vld [vmem:[%s747 + $0x20] sm:$0xff]
        %v753 = vld [vmem:[%s747 + $0x28] sm:$0xff]
        %v754 = vld [vmem:[%s747 + $0x30] sm:$0xff]
        %v755 = vld [vmem:[%s747 + $0x38] sm:$0xff]
        %v756 = vld [vmem:[%s747 + $0x40] sm:$0xff]
        %v757 = vld [vmem:[%s747 + $0x48] sm:$0xff]
        %v758 = vld [vmem:[%s747 + $0x50] sm:$0xff]
        %v759 = vld [vmem:[%s747 + $0x58] sm:$0xff]
        %v760 = vld [vmem:[%s747 + $0x60] sm:$0xff]
        %v761 = vld [vmem:[%s747 + $0x68] sm:$0xff]
        %v762 = vld [vmem:[%s747 + $0x70] sm:$0xff]
        %v763 = vld [vmem:[%s747 + $0x78] sm:$0xff]
        %v764 = vld [vmem:[%s747 + $0x80] sm:$0xff]
        %v765 = vld [vmem:[%s747 + $0x88] sm:$0xff]
        %v784 = vunpack.c.l.b16 %v748
        %v785 = vunpack.c.h.b16 %v748
        %v786 = vunpack.c.l.b16 %v749
        %v787 = vunpack.c.h.b16 %v749
        %v788 = vunpack.c.l.b16 %v750
        %v789 = vunpack.c.h.b16 %v750
        %v790 = vunpack.c.l.b16 %v751
        %v791 = vunpack.c.h.b16 %v751
        %v792 = vunpack.c.l.b16 %v752
        %v793 = vunpack.c.h.b16 %v752
        %v794 = vunpack.c.l.b16 %v753
        %v795 = vunpack.c.h.b16 %v753
        %v796 = vunpack.c.l.b16 %v754
        %v797 = vunpack.c.h.b16 %v754
        %v798 = vunpack.c.l.b16 %v755
        %v799 = vunpack.c.h.b16 %v755
        %v800 = vunpack.c.l.b16 %v756
        %v801 = vunpack.c.h.b16 %v756
        %v802 = vunpack.c.l.b16 %v757
        %v803 = vunpack.c.h.b16 %v757
        %v804 = vunpack.c.l.b16 %v758
        %v805 = vunpack.c.h.b16 %v758
        %v806 = vunpack.c.l.b16 %v759
        %v807 = vunpack.c.h.b16 %v759
        %v808 = vunpack.c.l.b16 %v760
        %v809 = vunpack.c.h.b16 %v760
        %v810 = vunpack.c.l.b16 %v761
        %v811 = vunpack.c.h.b16 %v761
        %v812 = vunpack.c.l.b16 %v762
        %v813 = vunpack.c.h.b16 %v762
        %v814 = vunpack.c.l.b16 %v763
        %v815 = vunpack.c.h.b16 %v763
        %v816 = vunpack.c.l.b16 %v764
        %v817 = vunpack.c.h.b16 %v764
        %v818 = vunpack.c.l.b16 %v765
        %v819 = vunpack.c.h.b16 %v765
        %v820 = vpack.c.b16 %v788, %v784
        %v821 = vpack.c.b16 %v789, %v785
        %v822 = vpack.c.b16 %v790, %v786
        %v823 = vpack.c.b16 %v791, %v787
        %v824 = vpack.c.b16 %v796, %v792
        %v825 = vpack.c.b16 %v797, %v793
        %v826 = vpack.c.b16 %v798, %v794
        %v827 = vpack.c.b16 %v799, %v795
        %v828 = vpack.c.b16 %v804, %v800
        %v829 = vpack.c.b16 %v805, %v801
        %v830 = vpack.c.b16 %v806, %v802
        %v831 = vpack.c.b16 %v807, %v803
        %v832 = vpack.c.b16 %v812, %v808
        %v833 = vpack.c.b16 %v813, %v809
        %v834 = vpack.c.b16 %v814, %v810
        %v835 = vpack.c.b16 %v815, %v811
        %v836 = vpack.c.b16 %v816, %v816
        %v837 = vpack.c.b16 %v817, %v817
        %v838 = vpack.c.b16 %v818, %v818
        %v839 = vpack.c.b16 %v819, %v819
        %v857 = vsel %vm413, %v836, 0
        %v860 = vsel %vm413, %v837, 0
        %v863 = vsel %vm413, %v838, 0
        %v866 = vsel %vm413, %v839, 0
        %868 = vmatprep.subr.bf16.mxu0 0
        %869 = vmatpush1.bf16.msra.mxu0 0
        %870 = vmatprep.subr.bf16.mxu0 0
        %871 = vmatpush1.bf16.msra.mxu0 0
        %872 = vmatprep.subr.bf16.mxu0 0
        %873 = vmatpush1.bf16.msra.mxu0 0
        %874 = vmatprep.subr.bf16.mxu0 %v860
        %875 = vmatpush1.bf16.msra.mxu0 %v857
        %876 = vmatprep.subr.bf16.mxu0 %v833
        %877 = vmatpush1.bf16.msra.mxu0 %v832
        %878 = vmatprep.subr.bf16.mxu0 %v829
        %879 = vmatpush1.bf16.msra.mxu0 %v828
        %880 = vmatprep.subr.bf16.mxu0 %v825
        %881 = vmatpush1.bf16.msra.mxu0 %v824
        %882 = vmatprep.subr.bf16.mxu0 %v821
        %883 = vmatpush1.bf16.msra.mxu0 %v820
        %884 = vmatprep.subr.bf16.mxu0 0
        %885 = vmatpush2.bf16.msra.mxu0 0
        %886 = vmatprep.subr.bf16.mxu0 0
        %887 = vmatpush2.bf16.msra.mxu0 0
        %888 = vmatprep.subr.bf16.mxu0 0
        %889 = vmatpush2.bf16.msra.mxu0 0
        %890 = vmatprep.subr.bf16.mxu0 0
        %891 = vmatpush2.bf16.msra.mxu0 0
        %892 = vmatprep.subr.bf16.mxu0 0
        %893 = vmatpush2.bf16.msra.mxu0 0
        %894 = vmatprep.subr.bf16.mxu0 0
        %895 = vmatpush2.bf16.msra.mxu0 0
        %896 = vmatprep.subr.bf16.mxu0 0
        %897 = vmatpush2.bf16.msra.mxu0 0
        %898 = vmatprep.subr.bf16.mxu0 0
        %899 = vmatpush2.bf16.msra.mxu0 0
        %900 = vmatprep.mubr.bf16.mxu0 0
        %901 = vmatmul.mubr.bf16.gmra.mxu0 %v408
        %v902 = vpop.f32.mrf.mxu0
        %v903 = vadd.f32 0.0, %v902
        %v904 = vpop.f32.mrf.mxu0
        %v905 = vadd.f32 0.0, %v904
        %v906 = vpop.f32.mrf.mxu0
        %v907 = vadd.f32 0.0, %v906
        %v908 = vpop.f32.mrf.mxu0
        %v909 = vadd.f32 0.0, %v908
        %910 = vmatprep.mubr.bf16.mxu0 0
        %911 = vmatmul.mubr.bf16.gmra.mxu0 %v411
        %v912 = vpop.f32.mrf.mxu0
        %v913 = vadd.f32 0.0, %v912
        %v914 = vpop.f32.mrf.mxu0
        %v915 = vadd.f32 0.0, %v914
        %v916 = vpop.f32.mrf.mxu0
        %v917 = vpop.f32.mrf.mxu0
        %918 = vdwg.mxu0
        %919 = vmatprep.subr.bf16.mxu0 0
        %920 = vmatpush1.bf16.msra.mxu0 0
        %921 = vmatprep.subr.bf16.mxu0 0
        %922 = vmatpush1.bf16.msra.mxu0 0
        %923 = vmatprep.subr.bf16.mxu0 0
        %924 = vmatpush1.bf16.msra.mxu0 0
        %925 = vmatprep.subr.bf16.mxu0 %v866
        %926 = vmatpush1.bf16.msra.mxu0 %v863
        %927 = vmatprep.subr.bf16.mxu0 %v835
        %928 = vmatpush1.bf16.msra.mxu0 %v834
        %929 = vmatprep.subr.bf16.mxu0 %v831
        %930 = vmatpush1.bf16.msra.mxu0 %v830
        %931 = vmatprep.subr.bf16.mxu0 %v827
        %932 = vmatpush1.bf16.msra.mxu0 %v826
        %933 = vmatprep.subr.bf16.mxu0 %v823
        %934 = vmatpush1.bf16.msra.mxu0 %v822
        %935 = vmatprep.subr.bf16.mxu0 0
        %936 = vmatpush2.bf16.msra.mxu0 0
        %937 = vmatprep.subr.bf16.mxu0 0
        %938 = vmatpush2.bf16.msra.mxu0 0
        %939 = vmatprep.subr.bf16.mxu0 0
        %940 = vmatpush2.bf16.msra.mxu0 0
        %941 = vmatprep.subr.bf16.mxu0 0
        %942 = vmatpush2.bf16.msra.mxu0 0
        %943 = vmatprep.subr.bf16.mxu0 0
        %944 = vmatpush2.bf16.msra.mxu0 0
        %945 = vmatprep.subr.bf16.mxu0 0
        %946 = vmatpush2.bf16.msra.mxu0 0
        %947 = vmatprep.subr.bf16.mxu0 0
        %948 = vmatpush2.bf16.msra.mxu0 0
        %949 = vmatprep.subr.bf16.mxu0 0
        %950 = vmatpush2.bf16.msra.mxu0 0
        %951 = vmatprep.mubr.bf16.mxu0 0
        %952 = vmatmul.mubr.bf16.gmra.mxu0 %v408
        %v953 = vpop.f32.mrf.mxu0
        %v954 = vadd.f32 0.0, %v953
        %v955 = vpop.f32.mrf.mxu0
        %v956 = vadd.f32 0.0, %v955
        %v957 = vpop.f32.mrf.mxu0
        %v958 = vadd.f32 0.0, %v957
        %v959 = vpop.f32.mrf.mxu0
        %v960 = vadd.f32 0.0, %v959
        %961 = vmatprep.mubr.bf16.mxu0 0
        %962 = vmatmul.mubr.bf16.gmra.mxu0 %v411
        %v963 = vpop.f32.mrf.mxu0
        %v964 = vadd.f32 0.0, %v963
        %v965 = vpop.f32.mrf.mxu0
        %v966 = vadd.f32 0.0, %v965
        %v967 = vpop.f32.mrf.mxu0
        %v968 = vpop.f32.mrf.mxu0
        %969 = vdwg.mxu0
        %vm982 = vcmask 1046528
        %v983 = vrot.slane %v680, 1
        %v984 = vrot.slane %v684, 1
        %v985 = vsel %vm982, %v983, %v984
        %v986 = vrot.slane %v682, 1
        %v987 = vrot.slane %v686, 1
        %v988 = vsel %vm982, %v986, %v987
        %v989 = vrot.slane %v731, 1
        %v990 = vrot.slane %v735, 1
        %v991 = vsel %vm982, %v989, %v990
        %v992 = vrot.slane %v733, 1
        %v993 = vrot.slane %v737, 1
        %v994 = vsel %vm982, %v992, %v993
        %v995 = vrot.slane %v690, 1
        %v996 = vsel %vm982, %v984, %v995
        %v997 = vrot.slane %v692, 1
        %v998 = vsel %vm982, %v987, %v997
        %v999 = vrot.slane %v741, 1
        %v1000 = vsel %vm982, %v990, %v999
        %v1001 = vrot.slane %v743, 1
        %v1002 = vsel %vm982, %v993, %v1001
        %v1011 = vadd.f32 %v461, %v985
        %v1012 = vadd.f32 %v463, %v988
        %v1013 = vadd.f32 %v510, %v991
        %v1014 = vadd.f32 %v512, %v994
        %v1015 = vadd.f32 %v465, %v996
        %v1016 = vadd.f32 %v467, %v998
        %v1017 = vadd.f32 %v514, %v1000
        %v1018 = vadd.f32 %v516, %v1002
        %vm1031 = vcmask 1045504
        %v1032 = vrot.slane %v903, 2
        %v1033 = vrot.slane %v907, 2
        %v1034 = vsel %vm1031, %v1032, %v1033
        %v1035 = vrot.slane %v905, 2
        %v1036 = vrot.slane %v909, 2
        %v1037 = vsel %vm1031, %v1035, %v1036
        %v1038 = vrot.slane %v954, 2
        %v1039 = vrot.slane %v958, 2
        %v1040 = vsel %vm1031, %v1038, %v1039
        %v1041 = vrot.slane %v956, 2
        %v1042 = vrot.slane %v960, 2
        %v1043 = vsel %vm1031, %v1041, %v1042
        %v1044 = vrot.slane %v913, 2
        %v1045 = vsel %vm1031, %v1033, %v1044
        %v1046 = vrot.slane %v915, 2
        %v1047 = vsel %vm1031, %v1036, %v1046
        %v1048 = vrot.slane %v964, 2
        %v1049 = vsel %vm1031, %v1039, %v1048
        %v1050 = vrot.slane %v966, 2
        %v1051 = vsel %vm1031, %v1042, %v1050
        %v1060 = vadd.f32 %v1011, %v1034
        %v1061 = vadd.f32 %v1012, %v1037
        %v1062 = vadd.f32 %v1013, %v1040
        %v1063 = vadd.f32 %v1014, %v1043
        %v1064 = vadd.f32 %v1015, %v1045
        %v1065 = vadd.f32 %v1016, %v1047
        %v1066 = vadd.f32 %v1017, %v1049
        %v1067 = vadd.f32 %v1018, %v1051
        %v1068 = vld [vmem:[#allocation8] sm:$0xf]
        %v1070 = vlaneseq
        %v1071 = vshrl.u32 %v1070, 7
        %v1072 = vsub.s32 0, %v1071
        %v1073 = vrot.slane %v1068, %v1072
        %v1074 = vlaneseq
        %v1075 = vshrl.u32 %v1074, 7
        %v1076 = vsub.s32 1, %v1075
        %v1077 = vrot.slane %v1068, %v1076
        %v1078 = vlaneseq
        %v1079 = vshrl.u32 %v1078, 7
        %v1080 = vsub.s32 2, %v1079
        %v1081 = vrot.slane %v1068, %v1080
        %v1082 = vlaneseq
        %v1083 = vshrl.u32 %v1082, 7
        %v1084 = vsub.s32 3, %v1083
        %v1085 = vrot.slane %v1068, %v1084
        %v1090 = vadd.f32 %v1060, %v1073
        %v1091 = vadd.f32 %v1061, %v1077
        %v1092 = vadd.f32 %v1062, %v1081
        %v1093 = vadd.f32 %v1063, %v1085
        %v1094 = vadd.f32 %v1064, %v1073
        %v1095 = vadd.f32 %v1065, %v1077
        %v1096 = vadd.f32 %v1066, %v1081
        %v1097 = vadd.f32 %v1067, %v1085
        %v1098 = vmax.f32 %v1090, 0.0
        %v1099 = vmax.f32 %v1091, 0.0
        %v1100 = vmax.f32 %v1092, 0.0
        %v1101 = vmax.f32 %v1093, 0.0
        %v1102 = vmax.f32 %v1094, 0.0
        %v1103 = vmax.f32 %v1095, 0.0
        %v1104 = vmax.f32 %v1096, 0.0
        %v1105 = vmax.f32 %v1097, 0.0
        %1108 = vrot.lane.b32.xlu0 %v1098, 96
        %v1109 = vpop.permute.xlu0 %1108
        %1110 = vrot.lane.b32.xlu0 %v1102, 96
        %v1111 = vpop.permute.xlu0 %1110
        %v1114 = vadd.f32 %v1098, %v1109
        %v1115 = vadd.f32 %v1102, %v1111
        %1116 = vrot.lane.b32.xlu0 %v1098, 64
        %v1117 = vpop.permute.xlu0 %1116
        %1118 = vrot.lane.b32.xlu0 %v1102, 64
        %v1119 = vpop.permute.xlu0 %1118
        %v1122 = vadd.f32 %v1114, %v1117
        %v1123 = vadd.f32 %v1115, %v1119
        %1124 = vrot.lane.b32.xlu0 %v1098, 32
        %v1125 = vpop.permute.xlu0 %1124
        %1126 = vrot.lane.b32.xlu0 %v1102, 32
        %v1127 = vpop.permute.xlu0 %1126
        %v1130 = vadd.f32 %v1122, %v1125
        %v1131 = vadd.f32 %v1123, %v1127
        %v1132 = vadd.f32 %v1130, %v1099
        %v1133 = vadd.f32 %v1131, %v1103
        %1136 = vrot.lane.b32.xlu0 %v1099, 96
        %v1137 = vpop.permute.xlu0 %1136
        %1138 = vrot.lane.b32.xlu0 %v1103, 96
        %v1139 = vpop.permute.xlu0 %1138
        %v1142 = vadd.f32 %v1132, %v1137
        %v1143 = vadd.f32 %v1133, %v1139
        %1144 = vrot.lane.b32.xlu0 %v1099, 64
        %v1145 = vpop.permute.xlu0 %1144
        %1146 = vrot.lane.b32.xlu0 %v1103, 64
        %v1147 = vpop.permute.xlu0 %1146
        %v1150 = vadd.f32 %v1142, %v1145
        %v1151 = vadd.f32 %v1143, %v1147
        %1152 = vrot.lane.b32.xlu0 %v1099, 32
        %v1153 = vpop.permute.xlu0 %1152
        %1154 = vrot.lane.b32.xlu0 %v1103, 32
        %v1155 = vpop.permute.xlu0 %1154
        %v1158 = vadd.f32 %v1150, %v1153
        %v1159 = vadd.f32 %v1151, %v1155
        %v1160 = vadd.f32 %v1158, %v1100
        %v1161 = vadd.f32 %v1159, %v1104
        %1164 = vrot.lane.b32.xlu0 %v1100, 96
        %v1165 = vpop.permute.xlu0 %1164
        %1166 = vrot.lane.b32.xlu0 %v1104, 96
        %v1167 = vpop.permute.xlu0 %1166
        %v1170 = vadd.f32 %v1160, %v1165
        %v1171 = vadd.f32 %v1161, %v1167
        %1172 = vrot.lane.b32.xlu0 %v1100, 64
        %v1173 = vpop.permute.xlu0 %1172
        %1174 = vrot.lane.b32.xlu0 %v1104, 64
        %v1175 = vpop.permute.xlu0 %1174
        %v1178 = vadd.f32 %v1170, %v1173
        %v1179 = vadd.f32 %v1171, %v1175
        %1180 = vrot.lane.b32.xlu0 %v1100, 32
        %v1181 = vpop.permute.xlu0 %1180
        %1182 = vrot.lane.b32.xlu0 %v1104, 32
        %v1183 = vpop.permute.xlu0 %1182
        %v1186 = vadd.f32 %v1178, %v1181
        %v1187 = vadd.f32 %v1179, %v1183
        %v1188 = vadd.f32 %v1186, %v1101
        %v1189 = vadd.f32 %v1187, %v1105
        %1192 = vrot.lane.b32.xlu0 %v1101, 96
        %v1193 = vpop.permute.xlu0 %1192
        %1194 = vrot.lane.b32.xlu0 %v1105, 96
        %v1195 = vpop.permute.xlu0 %1194
        %v1198 = vadd.f32 %v1188, %v1193
        %v1199 = vadd.f32 %v1189, %v1195
        %1200 = vrot.lane.b32.xlu0 %v1101, 64
        %v1201 = vpop.permute.xlu0 %1200
        %1202 = vrot.lane.b32.xlu0 %v1105, 64
        %v1203 = vpop.permute.xlu0 %1202
        %v1206 = vadd.f32 %v1198, %v1201
        %v1207 = vadd.f32 %v1199, %v1203
        %1208 = vrot.lane.b32.xlu0 %v1101, 32
        %v1209 = vpop.permute.xlu0 %1208
        %1210 = vrot.lane.b32.xlu0 %v1105, 32
        %v1211 = vpop.permute.xlu0 %1210
        %v1214 = vadd.f32 %v1206, %v1209
        %v1215 = vadd.f32 %v1207, %v1211
        %vm1216 = vcmask 261120
        %v1217 = vsel %vm1216, %v1214, 0.0
        %v1218 = vsel %vm1216, %v1215, 0.0
        %v1219 = vadd.f32 %v1217, %v1218
        %v1220 = vrot.slane %v1219, 4
        %v1221 = vadd.f32 %v1219, %v1220
        %v1222 = vrot.slane %v1221, 2
        %v1223 = vadd.f32 %v1221, %v1222
        %v1224 = vrot.slane %v1223, 1
        %v1225 = vadd.f32 %v1223, %v1224
        %v1226 = vmul.f32 %v1225, 0.00390625
        %vm1227 = vcmask 253952
        %1228 = vst.msk [vmem:[#allocation2] sm:$0x1] %vm1227, %v1226
        %v1229 = vld [vmem:[#allocation2] sm:$0x1]
        %v1230 = vpack.c.bf16 %v1229, %v1229
        %v1231 = vld [vmem:[#allocation9] sm:$0xff]
        %v1232 = vld [vmem:[#allocation9 + $0x8] sm:$0xf]
        %v1233 = vld [vmem:[#allocation9 + $0xc] sm:$0xff]
        %v1234 = vld [vmem:[#allocation9 + $0x14] sm:$0xf]
        %v1235 = vld [vmem:[#allocation9 + $0x18] sm:$0xff]
        %v1236 = vld [vmem:[#allocation9 + $0x20] sm:$0xf]
        %v1237 = vld [vmem:[#allocation9 + $0x24] sm:$0xff]
        %v1238 = vld [vmem:[#allocation9 + $0x2c] sm:$0xf]
        %v1239 = vld [vmem:[%s4] sm:$0x7]
        %v1248 = vunpack.c.l.b16 %v1231
        %v1249 = vunpack.c.h.b16 %v1231
        %v1250 = vunpack.c.l.b16 %v1232
        %v1251 = vunpack.c.l.b16 %v1233
        %v1252 = vunpack.c.h.b16 %v1233
        %v1253 = vunpack.c.l.b16 %v1234
        %v1254 = vunpack.c.l.b16 %v1235
        %v1255 = vunpack.c.h.b16 %v1235
        %v1256 = vunpack.c.l.b16 %v1236
        %v1257 = vunpack.c.l.b16 %v1237
        %v1258 = vunpack.c.h.b16 %v1237
        %v1259 = vunpack.c.l.b16 %v1238
        %v1260 = vpack.c.b16 %v1251, %v1248
        %v1261 = vpack.c.b16 %v1252, %v1249
        %v1262 = vpack.c.b16 %v1253, %v1250
        %v1263 = vpack.c.b16 %v1257, %v1254
        %v1264 = vpack.c.b16 %v1258, %v1255
        %v1265 = vpack.c.b16 %v1259, %v1256
        %v1273 = vlaneseq
        %v1274 = vshrl.u32 %v1273, 7
        %v1275 = vsub.s32 0, %v1274
        %v1276 = vrot.slane %v1239, %v1275
        %v1277 = vlaneseq
        %v1278 = vshrl.u32 %v1277, 7
        %v1279 = vsub.s32 1, %v1278
        %v1280 = vrot.slane %v1239, %v1279
        %v1281 = vlaneseq
        %v1282 = vshrl.u32 %v1281, 7
        %v1283 = vsub.s32 2, %v1282
        %v1284 = vrot.slane %v1239, %v1283
        %v1289 = vsel %vm1216, %v1230, 0
        %1291 = vmatprep.subr.bf16.mxu0 0
        %1292 = vmatpush1.bf16.msra.mxu0 0
        %1293 = vmatprep.subr.bf16.mxu0 0
        %1294 = vmatpush1.bf16.msra.mxu0 0
        %1295 = vmatprep.subr.bf16.mxu0 0
        %1296 = vmatpush1.bf16.msra.mxu0 0
        %1297 = vmatprep.subr.bf16.mxu0 0
        %1298 = vmatpush1.bf16.msra.mxu0 0
        %1299 = vmatprep.subr.bf16.mxu0 0
        %1300 = vmatpush1.bf16.msra.mxu0 0
        %1301 = vmatprep.subr.bf16.mxu0 0
        %1302 = vmatpush1.bf16.msra.mxu0 0
        %1303 = vmatprep.subr.bf16.mxu0 %v1264
        %1304 = vmatpush1.bf16.msra.mxu0 %v1263
        %1305 = vmatprep.subr.bf16.mxu0 %v1261
        %1306 = vmatpush1.bf16.msra.mxu0 %v1260
        %1307 = vmatprep.subr.bf16.mxu0 0
        %1308 = vmatpush2.bf16.msra.mxu0 0
        %1309 = vmatprep.subr.bf16.mxu0 0
        %1310 = vmatpush2.bf16.msra.mxu0 0
        %1311 = vmatprep.subr.bf16.mxu0 0
        %1312 = vmatpush2.bf16.msra.mxu0 0
        %1313 = vmatprep.subr.bf16.mxu0 0
        %1314 = vmatpush2.bf16.msra.mxu0 0
        %1315 = vmatprep.subr.bf16.mxu0 0
        %1316 = vmatpush2.bf16.msra.mxu0 0
        %1317 = vmatprep.subr.bf16.mxu0 0
        %1318 = vmatpush2.bf16.msra.mxu0 0
        %1319 = vmatprep.subr.bf16.mxu0 0
        %1320 = vmatpush2.bf16.msra.mxu0 0
        %1321 = vmatprep.subr.bf16.mxu0 0
        %1322 = vmatpush2.bf16.msra.mxu0 0
        %1323 = vmatprep.mubr.bf16.mxu0 0
        %1324 = vmatmul.mubr.bf16.gmra.mxu0 %v1289
        %v1325 = vpop.f32.mrf.mxu0
        %v1326 = vadd.f32 %v1276, %v1325
        %v1327 = vpop.f32.mrf.mxu0
        %v1328 = vadd.f32 %v1280, %v1327
        %v1329 = vpop.f32.mrf.mxu0
        %v1330 = vpop.f32.mrf.mxu0
        %1331 = vdwg.mxu0
        %1332 = vmatprep.subr.bf16.mxu0 0
        %1333 = vmatpush1.bf16.msra.mxu0 0
        %1334 = vmatprep.subr.bf16.mxu0 0
        %1335 = vmatpush1.bf16.msra.mxu0 0
        %1336 = vmatprep.subr.bf16.mxu0 0
        %1337 = vmatpush1.bf16.msra.mxu0 0
        %1338 = vmatprep.subr.bf16.mxu0 0
        %1339 = vmatpush1.bf16.msra.mxu0 0
        %1340 = vmatprep.subr.bf16.mxu0 0
        %1341 = vmatpush1.bf16.msra.mxu0 0
        %1342 = vmatprep.subr.bf16.mxu0 0
        %1343 = vmatpush1.bf16.msra.mxu0 0
        %1344 = vmatprep.subr.bf16.mxu0 0
        %1345 = vmatpush1.bf16.msra.mxu0 %v1265
        %1346 = vmatprep.subr.bf16.mxu0 0
        %1347 = vmatpush1.bf16.msra.mxu0 %v1262
        %1348 = vmatprep.subr.bf16.mxu0 0
        %1349 = vmatpush2.bf16.msra.mxu0 0
        %1350 = vmatprep.subr.bf16.mxu0 0
        %1351 = vmatpush2.bf16.msra.mxu0 0
        %1352 = vmatprep.subr.bf16.mxu0 0
        %1353 = vmatpush2.bf16.msra.mxu0 0
        %1354 = vmatprep.subr.bf16.mxu0 0
        %1355 = vmatpush2.bf16.msra.mxu0 0
        %1356 = vmatprep.subr.bf16.mxu0 0
        %1357 = vmatpush2.bf16.msra.mxu0 0
        %1358 = vmatprep.subr.bf16.mxu0 0
        %1359 = vmatpush2.bf16.msra.mxu0 0
        %1360 = vmatprep.subr.bf16.mxu0 0
        %1361 = vmatpush2.bf16.msra.mxu0 0
        %1362 = vmatprep.subr.bf16.mxu0 0
        %1363 = vmatpush2.bf16.msra.mxu0 0
        %1364 = vmatprep.mubr.bf16.mxu0 0
        %1365 = vmatmul.mubr.bf16.gmra.mxu0 %v1289
        %v1366 = vpop.f32.mrf.mxu0
        %v1367 = vadd.f32 %v1284, %v1366
        %v1368 = vpop.f32.mrf.mxu0
        %v1369 = vpop.f32.mrf.mxu0
        %v1370 = vpop.f32.mrf.mxu0
        %1371 = vdwg.mxu0
        %v1372 = vlaneseq
        %v1373 = vand.u32 %v1372, 127
        %v1374 = vadd.s32 %v1373, 128
        %v1375 = vadd.s32 %v1373, 256
        %vm1376 = vcmp.eq.s32.totalorder %v1373, 256
        %vm1377 = vcmp.eq.s32.totalorder %v1374, 256
        %vm1378 = vcmp.eq.s32.totalorder %v1375, 256
        %v1379 = vtanh.pop %v1326
        %v1380 = vtanh.pop %v1328
        %v1381 = vtanh.pop %v1367
        %v1382 = vsel %vm1376, %v1379, %v1326
        %v1383 = vsel %vm1377, %v1380, %v1328
        %v1384 = vsel %vm1378, %v1381, %v1367
        %v1388 = vcombine.low %v1382, %v1383
        %v1390 = vunpack.c.l.s4 1966171168
        %v1391 = vunpack.c.0.s8 %v1390
        %v1392 = vlaneseq
        %v1393 = vshrl.u32 %v1392, 7
        %v1394 = vsub.s32 %v1391, %v1393
        %v1395 = vrot.slane %v1388, %v1394
        %v1397 = vunpack.c.l.s4 1966171168
        %v1398 = vunpack.c.0.s8 %v1397
        %v1399 = vlaneseq
        %v1400 = vshrl.u32 %v1399, 7
        %v1401 = vsub.s32 %v1398, %v1400
        %v1402 = vrot.slane %v1384, %v1401
        %v1403 = vcombine.low %v1395, %v1402
        %v1405 = vunpack.c.l.s4 1966171168
        %v1406 = vunpack.c.0.s8 %v1405
        %v1407 = vlaneseq
        %v1408 = vshrl.u32 %v1407, 7
        %v1409 = vsub.s32 %v1406, %v1408
        %v1410 = vrot.slane %v1403, %v1409
        %v1412 = vlaneseq
        %vm1413 = vcmp.ge.s32.totalorder %v1412, 0
        %vm1414 = vcmp.lt.s32.totalorder %v1412, 384
        %vm1415 = vmand %vm1413, %vm1414
        %1416 = vst.msk [vmem:[%s284] sm:$0x7] %vm1415, %v1410
        %s1417 = sand.u32 %s142, 1
        %s1418 = scalar_lea.sflag [#allocation5], %s1417
        %s1419 = sand.u32 %s142, 1
        %s1420 = smul.addr %s1419, 3
        %s1421 = scalar_lea.vmem [#allocation11], %s1420
        // Predicated region
        $region57: #{tpu_custom_call.1} parent=39 // pred_check
          %p1422 = pneg %p152
        $region58: #{tpu_custom_call.1} parent=39 // pred_check_branch
          %1424 = sbr.rel (%p1422) target = $region60
        $region59: #{tpu_custom_call.1} parent=39 // pred_region
          %s1426 = ssub.s32 48, 48
          %1427 = vsyncadd %s1418, %s1426
          %s1428 = smul.addr %s24, 3
          %s1429 = smul.addr %s1428, 16
          %s1430 = scalar_lea.hbm %s5, %s1429
          %s1432 = sshll.u32 %s1421, 4
          %s1433 = int_to_ptr.vmem [resolvable:$true] %s1432
          %1435 = dma.vmem_to_hbm [thread:$0]  %s1433, 48, %s1430, %s1418
        $region60: #{tpu_custom_call.1} parent=39 // pred_fallthru
          _
      $region40: #{tpu_custom_call.1} parent=5 // pred_fallthru
        _
      %p1436 = scmp.le.s32.totalorder 2, %s19
      // Predicated region
      $region61: #{tpu_custom_call.1} parent=5 // pred_check
        %p1437 = pneg %p1436
      $region62: #{tpu_custom_call.1} parent=5 // pred_check_branch
        %1439 = sbr.rel (%p1437) target = $region64
      $region63: #{tpu_custom_call.1} parent=5 // pred_region
        %s1440 = ssub.s32 %s19, 2
        // Predicated region
        $region65: #{tpu_custom_call.1} parent=63 // pred_check
          %p1441 = pneg %p158
        $region66: #{tpu_custom_call.1} parent=63 // pred_check_branch
          %1443 = sbr.rel (%p1441) target = $region68
        $region67: #{tpu_custom_call.1} parent=63 // pred_region
          %s1444 = sand.u32 %s143, 1
          %s1445 = scalar_lea.sflag [#allocation5], %s1444
          %s1446 = sand.u32 %s143, 1
          %s1447 = smul.addr %s1446, 3
          %s1448 = scalar_lea.vmem [#allocation11], %s1447
          %1449 = dma.done %s1445, 48
        $region68: #{tpu_custom_call.1} parent=63 // pred_fallthru
          _
      $region64: #{tpu_custom_call.1} parent=5 // pred_fallthru
        _
    $region6: #{tpu_custom_call.1} parent=1 // loop_footer
      %s23 = sadd.s32 1, %s19
    $region7: #{tpu_custom_call.1} parent=1 // loop_footer_branch
      %18 = sbr.rel target = $region3
    $region8: #{tpu_custom_call.1} parent=1 // loop_exit
      _
    %1450 = vsyncpa [#allocation4], 1
    %s1451 = scalar_lea.sflag [#allocation4], 1
    %1452 = vsyncpa %s1451, 1
    %1453 = vsyncpa [#allocation7], 1
    %1454 = vsyncpa [#allocation10], 1
    %1455 = vsyncpa [#allocation5], 1
    %s1456 = scalar_lea.sflag [#allocation5], 1
    %1457 = vsyncpa %s1456, 1

</llo_original>
